<compile_context>
chip_gen: v6e
topology: v6e:2x2x1
jax: 0.10.0
libtpu: 0.0.40
codegen_flags: <defaults>
</compile_context>

<pallas_src>
import numpy as np

import jax
import jax.numpy as jnp
from jax.experimental import pallas as pl
from jax.experimental.pallas import tpu as pltpu


def _hyper_head_kernel(sel_ref, x_ref, w_ref, b_ref, out_ref):
    """Single-step fused hypernet head.

    sel_ref : (R, EN)  bf16  0/1 shot-selection matrix (R = E*num_class, EN = E*N)
    x_ref   : (EN, C)  bf16  features (1x1 spatial squeezed, episodes folded)
    w_ref   : (C, P)   bf16  fused pre-transposed [W_w^T | W_b^T] / num_shot, lane-padded
    b_ref   : (1, P)   f32   fused conv biases [b_w | b_b], lane-padded
    out_ref : (R, P)   f32   fused output [weight | bias | zero-pad]
    """
    # Per-class shot-SUM on the MXU (bf16 operands, f32 accumulation).
    xs = jnp.dot(sel_ref[...], x_ref[...], preferred_element_type=jnp.float32)
    # Fused predictor matmul; the 1/num_shot mean scale is folded into w_ref.
    y = jnp.dot(xs.astype(w_ref.dtype), w_ref[...],
                preferred_element_type=jnp.float32)
    # Lane-dense (P = multiple of 128) f32 store.
    out_ref[...] = y + b_ref[...]


def make_selection_matrix(num_episodes, num_class, num_shot):
    """0/1 block-diagonal shot-selection matrix; entries exactly 1 (bf16-exact).

    Built host-side with numpy at init time (zero runtime cost per forward).
    Row r selects the `num_shot` consecutive rows of class r (episodes folded).
    """
    rows = num_episodes * num_class
    cols = num_episodes * num_class * num_shot
    sel = np.zeros((rows, cols), dtype=np.float32)
    c = np.arange(cols)
    sel[c // num_shot, c] = 1.0
    return jnp.asarray(sel, dtype=jnp.bfloat16)


def prepare_fused_params(ww, bw, wb, bb, num_shot):
    """Init-time (NOT per-forward) fusion of the two 1x1-conv predictors.

    Returns:
      w_cat : (C, P) bf16 = [W_w^T | W_b^T] * (1/num_shot), zero-padded to P
      b_cat : (1, P) f32  = [b_w | b_b], zero-padded
    where P = 2C rounded up to a multiple of 128 (lane-dense output).
    The 1/num_shot scale is applied in f32 BEFORE the bf16 cast.
    """
    C = ww.shape[0]
    P = ((2 * C + 127) // 128) * 128
    w_cat = jnp.concatenate([ww.T, wb.T], axis=1).astype(jnp.float32)
    w_cat = w_cat * (1.0 / num_shot)
    w_cat = jnp.pad(w_cat, ((0, 0), (0, P - 2 * C))).astype(jnp.bfloat16)
    b_cat = jnp.pad(jnp.concatenate([bw, bb]).astype(jnp.float32),
                    (0, P - 2 * C)).reshape(1, P)
    return w_cat, b_cat


def hyper_net_head(feature, w_cat, b_cat, sel, num_shot):
    """BaseHyperNetHead.forward.

    feature : (N, C, 1, 1) single episode (module-exact) or (E, N, C, 1, 1).
    w_cat, b_cat : from prepare_fused_params (precomputed once).
    sel     : from make_selection_matrix(E, num_class, num_shot).
    Returns (weight, bias), each (num_class, C, 1, 1) (or with a leading E).
    """
    squeeze_episode = feature.ndim == 4
    if squeeze_episode:
        feature = feature[None]
    E, N, C, S1, S2 = feature.shape
    assert S1 == 1 and S2 == 1
    assert N % num_shot == 0
    num_class = N // num_shot
    R = E * num_class
    EN = E * N
    P = w_cat.shape[1]
    assert sel.shape == (R, EN)

    x = feature.reshape(EN, C).astype(jnp.bfloat16)

    out = pl.pallas_call(
        _hyper_head_kernel,
        out_shape=jax.ShapeDtypeStruct((R, P), jnp.float32),
        grid=(1,),
        in_specs=[
            pl.BlockSpec((R, EN), lambda i: (0, 0)),   # selection matrix
            pl.BlockSpec((EN, C), lambda i: (0, 0)),   # folded activations
            pl.BlockSpec((C, P), lambda i: (0, 0)),    # fused weights
            pl.BlockSpec((1, P), lambda i: (0, 0)),    # fused biases
        ],
        out_specs=pl.BlockSpec((R, P), lambda i: (0, 0)),
        compiler_params=pltpu.CompilerParams(
            dimension_semantics=("arbitrary",)),       # single step; no megacore split
    )(sel, x, w_cat, b_cat)

    weight = out[:, :C].reshape(E, num_class, C, 1, 1)
    bias = out[:, C:2 * C].reshape(E, num_class, C, 1, 1)
    if squeeze_episode:
        weight, bias = weight[0], bias[0]
    return weight, bias


def _reference(feature, ww, bw, wb, bb, num_shot):
    """Pure-JAX f32 reference mirroring the PyTorch forward exactly."""
    N, C, _, _ = feature.shape
    num_class = N // num_shot
    x = feature.reshape(N, C)
    w_full = x @ ww.T + bw            # 1x1 conv on (N, C, 1, 1)
    b_full = x @ wb.T + bb
    w = w_full.reshape(num_class, num_shot, C).mean(axis=1)
    b = b_full.reshape(num_class, num_shot, C).mean(axis=1)
    return w.reshape(num_class, C, 1, 1), b.reshape(num_class, C, 1, 1)


if __name__ == "__main__":
    num_shot = 5
    num_class = 4
    N = num_shot * num_class          # 20
    C = 32
    E = 3                             # episodes, folded into a single kernel step

    key = jax.random.PRNGKey(0)
    k_feat, k_ww, k_bw, k_wb, k_bb = jax.random.split(key, 5)

    feature = jax.random.normal(k_feat, (E, N, C, 1, 1), dtype=jnp.float32)
    ww = jax.random.normal(k_ww, (C, C), dtype=jnp.float32) * 0.1
    bw = jax.random.normal(k_bw, (C,), dtype=jnp.float32) * 0.1
    wb = jax.random.normal(k_wb, (C, C), dtype=jnp.float32) * 0.1
    bb = jax.random.normal(k_bb, (C,), dtype=jnp.float32) * 0.1

    # Init-time preparation (hoisted out of the per-call hot path).
    w_cat, b_cat = prepare_fused_params(ww, bw, wb, bb, num_shot)
    sel_batched = make_selection_matrix(E, num_class, num_shot)
    sel_single = make_selection_matrix(1, num_class, num_shot)

    # Batched (episodes folded into one kernel invocation) path.
    w_out, b_out = hyper_net_head(feature, w_cat, b_cat, sel_batched, num_shot)
    jax.block_until_ready((w_out, b_out))
    assert w_out.shape == (E, num_class, C, 1, 1)
    assert b_out.shape == (E, num_class, C, 1, 1)

    # Single-episode (module-exact) path.
    w1, b1 = hyper_net_head(feature[0], w_cat, b_cat, sel_single, num_shot)
    jax.block_until_ready((w1, b1))
    assert w1.shape == (num_class, C, 1, 1)
    assert b1.shape == (num_class, C, 1, 1)

    # Validate against the f32 reference (bf16 operands -> loose-ish tolerance).
    ok = True
    for e in range(E):
        w_ref, b_ref = _reference(feature[e], ww, bw, wb, bb, num_shot)
        ok &= bool(jnp.allclose(w_out[e], w_ref, atol=2e-2, rtol=2e-2))
        ok &= bool(jnp.allclose(b_out[e], b_ref, atol=2e-2, rtol=2e-2))
    w_ref0, b_ref0 = _reference(feature[0], ww, bw, wb, bb, num_shot)
    ok &= bool(jnp.allclose(w1, w_ref0, atol=2e-2, rtol=2e-2))
    ok &= bool(jnp.allclose(b1, b_ref0, atol=2e-2, rtol=2e-2))
    assert ok

    print("KERNEL_OK")
</pallas_src>

<mosaic_0001>
module attributes {stable_mosaic.version = 11 : i64} {
  func.func @_hyper_head_kernel(%arg0: i32, %arg1: memref<12x60xbf16, #tpu.memory_space<vmem>>, %arg2: memref<60x32xbf16, #tpu.memory_space<vmem>>, %arg3: memref<32x128xbf16, #tpu.memory_space<vmem>>, %arg4: memref<1x128xf32, #tpu.memory_space<vmem>>, %arg5: memref<12x128xf32, #tpu.memory_space<vmem>>) attributes {dimension_semantics = [#tpu.dimension_semantics<arbitrary>], iteration_bounds = array<i64: 1>, scalar_prefetch = 0 : i64, scratch_operands = 0 : i64, tpu.core_type = #tpu.core_type<tc>, window_params = [{pipeline_mode = #tpu.pipeline_mode<synchronous>, transform_indices = @transform_0, window_bounds = array<i64: 12, 60>}, {pipeline_mode = #tpu.pipeline_mode<synchronous>, transform_indices = @transform_1, window_bounds = array<i64: 60, 32>}, {pipeline_mode = #tpu.pipeline_mode<synchronous>, transform_indices = @transform_2, window_bounds = array<i64: 32, 128>}, {pipeline_mode = #tpu.pipeline_mode<synchronous>, transform_indices = @transform_3, window_bounds = array<i64: 1, 128>}, {pipeline_mode = #tpu.pipeline_mode<synchronous>, transform_indices = @transform_4, window_bounds = array<i64: 12, 128>}]} {
    %c0 = arith.constant 0 : index
    %c0_0 = arith.constant 0 : index
    %0 = vector.load %arg1[%c0, %c0_0] : memref<12x60xbf16, #tpu.memory_space<vmem>>, vector<12x60xbf16>
    %c0_1 = arith.constant 0 : index
    %c0_2 = arith.constant 0 : index
    %1 = vector.load %arg2[%c0_1, %c0_2] : memref<60x32xbf16, #tpu.memory_space<vmem>>, vector<60x32xbf16>
    %cst = arith.constant dense<0.000000e+00> : vector<12x32xf32>
    %2 = tpu.matmul %0, %1, %cst {dimension_numbers = #tpu.dot_dimension_numbers<[1], [0], [0], [1], [0, 0, 1, 1], [], []>} : vector<12x60xbf16>, vector<60x32xbf16>, vector<12x32xf32> -> vector<12x32xf32>
    %3 = arith.truncf %2 : vector<12x32xf32> to vector<12x32xbf16>
    %c0_3 = arith.constant 0 : index
    %c0_4 = arith.constant 0 : index
    %4 = vector.load %arg3[%c0_3, %c0_4] : memref<32x128xbf16, #tpu.memory_space<vmem>>, vector<32x128xbf16>
    %cst_5 = arith.constant dense<0.000000e+00> : vector<12x128xf32>
    %5 = tpu.matmul %3, %4, %cst_5 {dimension_numbers = #tpu.dot_dimension_numbers<[1], [0], [0], [1], [0, 0, 1, 1], [], []>} : vector<12x32xbf16>, vector<32x128xbf16>, vector<12x128xf32> -> vector<12x128xf32>
    %c0_6 = arith.constant 0 : index
    %c0_7 = arith.constant 0 : index
    %6 = vector.load %arg4[%c0_6, %c0_7] : memref<1x128xf32, #tpu.memory_space<vmem>>, vector<1x128xf32>
    %7 = vector.broadcast %6 : vector<1x128xf32> to vector<12x128xf32>
    %8 = arith.addf %5, %7 : vector<12x128xf32>
    %c0_8 = arith.constant 0 : index
    %c0_9 = arith.constant 0 : index
    %9 = vector.load %arg5[%c0_8, %c0_9] : memref<12x128xf32, #tpu.memory_space<vmem>>, vector<12x128xf32>
    tpu.vector_store %arg5[%c0_8, %c0_9], %8 {strides = array<i32>} : memref<12x128xf32, #tpu.memory_space<vmem>>, vector<12x128xf32>,
    return
  }
  func.func @transform_0(%arg0: i32) -> (i32, i32) {
    %c0_i32 = arith.constant 0 : i32
    %c0_i32_0 = arith.constant 0 : i32
    %c0_i32_1 = arith.constant 0 : i32
    return %c0_i32, %c0_i32_0 : i32, i32
  }
  func.func @transform_1(%arg0: i32) -> (i32, i32) {
    %c0_i32 = arith.constant 0 : i32
    %c0_i32_0 = arith.constant 0 : i32
    %c0_i32_1 = arith.constant 0 : i32
    return %c0_i32, %c0_i32_0 : i32, i32
  }
  func.func @transform_2(%arg0: i32) -> (i32, i32) {
    %c0_i32 = arith.constant 0 : i32
    %c0_i32_0 = arith.constant 0 : i32
    %c0_i32_1 = arith.constant 0 : i32
    return %c0_i32, %c0_i32_0 : i32, i32
  }
  func.func @transform_3(%arg0: i32) -> (i32, i32) {
    %c0_i32 = arith.constant 0 : i32
    %c0_i32_0 = arith.constant 0 : i32
    %c0_i32_1 = arith.constant 0 : i32
    return %c0_i32, %c0_i32_0 : i32, i32
  }
  func.func @transform_4(%arg0: i32) -> (i32, i32) {
    %c0_i32 = arith.constant 0 : i32
    %c0_i32_0 = arith.constant 0 : i32
    %c0_i32_1 = arith.constant 0 : i32
    return %c0_i32, %c0_i32_0 : i32, i32
  }
}

</mosaic_0001>

<llo_original>
// kernel: tpu_custom_call.1
$region0: #{tpu_custom_call.1}
  #allocation0 [shape = 'u32[]', space=smem, size = 0x4, offset = 0x4, fixed_abs, tag = 'smem constant byte address 0x4 - core index']
  #allocation1 [shape = 'u32[144,128]{1,0:T(1,128)}', space=vmem, size = 0x12000, scoped, tag = 'internal scratch']
  %s0 = inlined_call_operand.vmem [shape: bf16[12,60], index: 0, kind: input, shape index: {}]
  %s1 = inlined_call_operand.vmem [shape: bf16[60,32], index: 1, kind: input, shape index: {}]
  %s2 = inlined_call_operand.vmem [shape: bf16[32,128], index: 2, kind: input, shape index: {}]
  %s3 = inlined_call_operand.vmem [shape: f32[1,128], index: 3, kind: input, shape index: {}]
  %s4 = inlined_call_operand.hbm [shape: f32[12,128], index: 4, kind: output, shape index: {}]
  %s5 = sld [smem:[#allocation0]]
  $region26: #{tpu_custom_call.1} parent=0
    _
  %s7 = ssub.s32 1, %s5
  %s8 = scalar_select 0, %s7, %s5
  $region1: #{tpu_custom_call.1} parent=0
    #allocation2 [shape = 'u8[8192]{0}', space=vmem, size = 0x2000, scoped, tag = 'output window, operand 0, single buffered']
    #allocation3 [shape = 's32[1]{0}', space=sflag, size = 0x4, scoped, tag = 'scoped memory for tpu_custom_call.1']
    %9 = vsyncpa [#allocation3], 0
    // Predicated region
    $region2: #{tpu_custom_call.1} parent=1 // pred_check
      _
    $region3: #{tpu_custom_call.1} parent=1 // pred_check_branch
      %11 = sbr.rel (0) target = $region5
    $region4: #{tpu_custom_call.1} parent=1 // pred_region
      _
    $region5: #{tpu_custom_call.1} parent=1 // pred_fallthru
      _
    // Predicated region
    $region6: #{tpu_custom_call.1} parent=1 // pred_check
      _
    $region7: #{tpu_custom_call.1} parent=1 // pred_check_branch
      %13 = sbr.rel (0) target = $region9
    $region8: #{tpu_custom_call.1} parent=1 // pred_region
      _
    $region9: #{tpu_custom_call.1} parent=1 // pred_fallthru
      _
    // Predicated region
    $region10: #{tpu_custom_call.1} parent=1 // pred_check
      _
    $region11: #{tpu_custom_call.1} parent=1 // pred_check_branch
      %15 = sbr.rel (0) target = $region13
    $region12: #{tpu_custom_call.1} parent=1 // pred_region
      _
    $region13: #{tpu_custom_call.1} parent=1 // pred_fallthru
      _
    // Predicated region
    $region14: #{tpu_custom_call.1} parent=1 // pred_check
      _
    $region15: #{tpu_custom_call.1} parent=1 // pred_check_branch
      %17 = sbr.rel (0) target = $region17
    $region16: #{tpu_custom_call.1} parent=1 // pred_region
      _
    $region17: #{tpu_custom_call.1} parent=1 // pred_fallthru
      _
    %v19 = vld [vmem:[%s0] sm:$0xf]
    %v20 = vld [vmem:[%s0 + $0x4] sm:$0x3]
    %v21 = vld [vmem:[%s1] sm:$0xf]
    %v22 = vld [vmem:[%s1 + $0x4] sm:$0xf]
    %v23 = vld [vmem:[%s1 + $0x8] sm:$0xf]
    %v24 = vld [vmem:[%s1 + $0xc] sm:$0xf]
    %v25 = vld [vmem:[%s1 + $0x10] sm:$0xf]
    %v26 = vld [vmem:[%s1 + $0x14] sm:$0xf]
    %v27 = vld [vmem:[%s1 + $0x18] sm:$0xf]
    %v28 = vld [vmem:[%s1 + $0x1c] sm:$0x3]
    %v31 = vunpack.c.l.b16 %v19
    %v32 = vunpack.c.l.b16 %v20
    %v33 = vpack.c.b16 %v32, %v31
    %v42 = vunpack.c.l.b16 %v21
    %v43 = vunpack.c.l.b16 %v22
    %v44 = vunpack.c.l.b16 %v23
    %v45 = vunpack.c.l.b16 %v24
    %v46 = vunpack.c.l.b16 %v25
    %v47 = vunpack.c.l.b16 %v26
    %v48 = vunpack.c.l.b16 %v27
    %v49 = vunpack.c.l.b16 %v28
    %v50 = vpack.c.b16 %v43, %v42
    %v51 = vpack.c.b16 %v45, %v44
    %v52 = vpack.c.b16 %v47, %v46
    %v53 = vpack.c.b16 %v49, %v48
    %vm57 = vcmask 490496
    %v59 = vsel %vm57, %v33, 0
    %vm61 = vcmask 1045504
    %v63 = vsel %vm61, %v53, 0
    %65 = vmatprep.subr.bf16.mxu0 0
    %66 = vmatpush1.bf16.msra.mxu0 0
    %67 = vmatprep.subr.bf16.mxu0 0
    %68 = vmatpush1.bf16.msra.mxu0 0
    %69 = vmatprep.subr.bf16.mxu0 0
    %70 = vmatpush1.bf16.msra.mxu0 0
    %71 = vmatprep.subr.bf16.mxu0 0
    %72 = vmatpush1.bf16.msra.mxu0 0
    %73 = vmatprep.subr.bf16.mxu0 0
    %74 = vmatpush1.bf16.msra.mxu0 %v63
    %75 = vmatprep.subr.bf16.mxu0 0
    %76 = vmatpush1.bf16.msra.mxu0 %v52
    %77 = vmatprep.subr.bf16.mxu0 0
    %78 = vmatpush1.bf16.msra.mxu0 %v51
    %79 = vmatprep.subr.bf16.mxu0 0
    %80 = vmatpush1.bf16.msra.mxu0 %v50
    %81 = vmatprep.subr.bf16.mxu0 0
    %82 = vmatpush2.bf16.msra.mxu0 0
    %83 = vmatprep.subr.bf16.mxu0 0
    %84 = vmatpush2.bf16.msra.mxu0 0
    %85 = vmatprep.subr.bf16.mxu0 0
    %86 = vmatpush2.bf16.msra.mxu0 0
    %87 = vmatprep.subr.bf16.mxu0 0
    %88 = vmatpush2.bf16.msra.mxu0 0
    %89 = vmatprep.subr.bf16.mxu0 0
    %90 = vmatpush2.bf16.msra.mxu0 0
    %91 = vmatprep.subr.bf16.mxu0 0
    %92 = vmatpush2.bf16.msra.mxu0 0
    %93 = vmatprep.subr.bf16.mxu0 0
    %94 = vmatpush2.bf16.msra.mxu0 0
    %95 = vmatprep.subr.bf16.mxu0 0
    %96 = vmatpush2.bf16.msra.mxu0 0
    %97 = vmatprep.mubr.bf16.mxu0 0
    %98 = vmatmul.mubr.bf16.gmra.mxu0 %v59
    %v99 = vpop.f32.mrf.mxu0
    %v100 = vadd.f32 0.0, %v99
    %v101 = vpop.f32.mrf.mxu0
    %v102 = vpop.f32.mrf.mxu0
    %v103 = vadd.f32 0.0, %v102
    %v104 = vpop.f32.mrf.mxu0
    %105 = vdwg.mxu0
    %v106 = vpack.c.bf16 %v103, %v100
    %v107 = vld [vmem:[%s2] sm:$0xf]
    %v108 = vld [vmem:[%s2 + $0x4] sm:$0xf]
    %v109 = vld [vmem:[%s2 + $0x8] sm:$0xf]
    %v110 = vld [vmem:[%s2 + $0xc] sm:$0xf]
    %v111 = vld [vmem:[%s3] sm:$0x1]
    %v113 = vlaneseq
    %v114 = vshrl.u32 %v113, 7
    %v115 = vsub.s32 0, %v114
    %v116 = vrot.slane %v111, %v115
    %v122 = vunpack.c.l.b16 %v107
    %v123 = vunpack.c.l.b16 %v108
    %v124 = vunpack.c.l.b16 %v109
    %v125 = vunpack.c.l.b16 %v110
    %v126 = vpack.c.b16 %v123, %v122
    %v127 = vpack.c.b16 %v125, %v124
    %vm130 = vcmask 261120
    %v132 = vsel %vm130, %v106, 0
    %134 = vmatprep.subr.bf16.mxu0 0
    %135 = vmatpush1.bf16.msra.mxu0 0
    %136 = vmatprep.subr.bf16.mxu0 0
    %137 = vmatpush1.bf16.msra.mxu0 0
    %138 = vmatprep.subr.bf16.mxu0 0
    %139 = vmatpush1.bf16.msra.mxu0 0
    %140 = vmatprep.subr.bf16.mxu0 0
    %141 = vmatpush1.bf16.msra.mxu0 0
    %142 = vmatprep.subr.bf16.mxu0 0
    %143 = vmatpush1.bf16.msra.mxu0 0
    %144 = vmatprep.subr.bf16.mxu0 0
    %145 = vmatpush1.bf16.msra.mxu0 0
    %146 = vmatprep.subr.bf16.mxu0 0
    %147 = vmatpush1.bf16.msra.mxu0 %v127
    %148 = vmatprep.subr.bf16.mxu0 0
    %149 = vmatpush1.bf16.msra.mxu0 %v126
    %150 = vmatprep.subr.bf16.mxu0 0
    %151 = vmatpush2.bf16.msra.mxu0 0
    %152 = vmatprep.subr.bf16.mxu0 0
    %153 = vmatpush2.bf16.msra.mxu0 0
    %154 = vmatprep.subr.bf16.mxu0 0
    %155 = vmatpush2.bf16.msra.mxu0 0
    %156 = vmatprep.subr.bf16.mxu0 0
    %157 = vmatpush2.bf16.msra.mxu0 0
    %158 = vmatprep.subr.bf16.mxu0 0
    %159 = vmatpush2.bf16.msra.mxu0 0
    %160 = vmatprep.subr.bf16.mxu0 0
    %161 = vmatpush2.bf16.msra.mxu0 0
    %162 = vmatprep.subr.bf16.mxu0 0
    %163 = vmatpush2.bf16.msra.mxu0 0
    %164 = vmatprep.subr.bf16.mxu0 0
    %165 = vmatpush2.bf16.msra.mxu0 0
    %166 = vmatprep.mubr.bf16.mxu0 0
    %167 = vmatmul.mubr.bf16.gmra.mxu0 %v132
    %v168 = vpop.f32.mrf.mxu0
    %v169 = vadd.f32 %v116, %v168
    %v170 = vpop.f32.mrf.mxu0
    %v171 = vpop.f32.mrf.mxu0
    %v172 = vadd.f32 %v116, %v171
    %v173 = vpop.f32.mrf.mxu0
    %174 = vdwg.mxu0
    %175 = vst [vmem:[#allocation2] sm:$0xff] %v169
    %176 = vst [vmem:[#allocation2 + $0x8] sm:$0xf] %v172
    // Predicated region
    $region18: #{tpu_custom_call.1} parent=1 // pred_check
      _
    $region19: #{tpu_custom_call.1} parent=1 // pred_check_branch
      %178 = sbr.rel (0) target = $region21
    $region20: #{tpu_custom_call.1} parent=1 // pred_region
      %s180 = ssub.s32 256, 256
      %181 = vsyncadd [#allocation3], %s180
      %s182 = sshll.u32 [#allocation2], 4
      %s183 = int_to_ptr.vmem [resolvable:$true] %s182
      %188 = dma.vmem_to_hbm [thread:$0]  %s183, 256, %s4, [#allocation3], 128, 128, 8
    $region21: #{tpu_custom_call.1} parent=1 // pred_fallthru
      _
    // Predicated region
    $region22: #{tpu_custom_call.1} parent=1 // pred_check
      _
    $region23: #{tpu_custom_call.1} parent=1 // pred_check_branch
      %190 = sbr.rel (0) target = $region25
    $region24: #{tpu_custom_call.1} parent=1 // pred_region
      %191 = dma.done [#allocation3], 256
    $region25: #{tpu_custom_call.1} parent=1 // pred_fallthru
      _
    %192 = vsyncpa [#allocation3], 1

</llo_original>
